<compile_context>
chip_gen: v6e
topology: v6e:2x2x1
jax: 0.10.0
libtpu: 0.0.40
codegen_flags: <defaults>
</compile_context>

<pallas_src>
import functools

import jax
import jax.numpy as jnp
from jax.experimental import pallas as pl
from jax.experimental.pallas import tpu as pltpu


# ----------------------------------------------------------------------------
# Kernel
# ----------------------------------------------------------------------------
def twig_fused_kernel(x_ref, w_ref, b_ref, out_ref, *, rr1, rw):
    """x_ref:  [TMp, rr1]          bf16  rep-packed (struct|hps|pad) input tile
       w_ref:  [rr1 + 3*rw, rw]    bf16  (W1_bd ; W2_bd ; Wi_bd ; Wf_cols)
       b_ref:  [8, rw]             f32   (b1 ; b2 ; bi(+unit lane) ; zeros)
       out_ref:[TMp, rep]          f32   rep sigmoids per packed row
    """
    f32 = jnp.float32
    bf16 = jnp.bfloat16

    x = x_ref[...]                                   # bf16, fed to MXU directly

    # Static, sublane-pack-aligned slices of the bf16 weight slab.
    w1 = w_ref[0:rr1, :]                             # [rr1, rw]
    w2 = w_ref[rr1:rr1 + rw, :]                      # [rw, rw]
    wi = w_ref[rr1 + rw:rr1 + 2 * rw, :]             # [rw, rw]
    wf = w_ref[rr1 + 2 * rw:rr1 + 3 * rw, :]         # [rw, rw] (only cols < rep live)

    b_all = b_ref[...]                               # [8, rw] f32, loaded once
    b1 = b_all[0:1, :]
    b2 = b_all[1:2, :]
    bi = b_all[2:3, :]                               # lane 8 of each block = 1.0 (carries b_f)

    # Four single-pass bf16 MXU matmuls with f32 accumulation; bias/ReLU in f32.
    h = jnp.maximum(jnp.dot(x, w1, preferred_element_type=f32) + b1, 0.0)
    h = jnp.maximum(jnp.dot(h.astype(bf16), w2, preferred_element_type=f32) + b2, 0.0)
    h = jnp.maximum(jnp.dot(h.astype(bf16), wi, preferred_element_type=f32) + bi, 0.0)
    logits = jnp.dot(h.astype(bf16), wf, preferred_element_type=f32)   # [TMp, rw]
    logits = logits[:, 0:out_ref.shape[1]]                              # [TMp, rep]

    # exp on EUP; divide touches only the rep live lanes.
    out_ref[...] = 1.0 / (1.0 + jnp.exp(-logits))


# ----------------------------------------------------------------------------
# Wrapper
# ----------------------------------------------------------------------------
def twig_base_forward(x_struct, x_hps, packed_params, *, tile_m=2048):
    """TWIG_Base forward.  Any batch size; batch is zero-padded to the tile."""
    w_slab, b_slab, r1, rep = packed_params
    rr1 = rep * r1
    rw = rep * 16

    n = x_struct.shape[0]
    n_in = x_struct.shape[1] + x_hps.shape[1]

    # One contiguous bf16 input slab (halves HBM read bytes vs f32).
    x = jnp.concatenate([x_struct, x_hps], axis=1)
    if n_in < r1:
        x = jnp.pad(x, ((0, 0), (0, r1 - n_in)))
    x = x.astype(jnp.bfloat16)

    # Tile granule: rep rows per packed row, 8 packed rows per sublane group.
    granule = 8 * rep
    tile_eff = min(tile_m, pl.cdiv(n, granule) * granule)
    tile_eff = max(granule, (tile_eff // granule) * granule)
    n_tiles = pl.cdiv(n, tile_eff)
    n_pad = n_tiles * tile_eff
    if n_pad != n:
        x = jnp.pad(x, ((0, n_pad - n), (0, 0)))

    tmp = tile_eff // rep                      # packed rows per tile (multiple of 8)
    xp = x.reshape(n_pad // rep, rr1)          # free reshape: rows are contiguous

    grid_spec = pltpu.PrefetchScalarGridSpec(
        num_scalar_prefetch=0,
        grid=(n_tiles,),
        in_specs=[
            # NOTE: add pipeline_mode=pl.Buffered(3) here if xprof shows exposed DMA.
            pl.BlockSpec((tmp, rr1), lambda i: (i, 0)),      # packed input tile (bf16)
            pl.BlockSpec(w_slab.shape, lambda i: (0, 0)),    # weight slab, fetched once
            pl.BlockSpec(b_slab.shape, lambda i: (0, 0)),    # bias slab, fetched once
        ],
        out_specs=pl.BlockSpec((tmp, rep), lambda i: (i, 0)),
    )

    out = pl.pallas_call(
        functools.partial(twig_fused_kernel, rr1=rr1, rw=rw),
        out_shape=jax.ShapeDtypeStruct((n_pad // rep, rep), jnp.float32),
        grid_spec=grid_spec,
        compiler_params=pltpu.CompilerParams(
            # Batch tiles are independent -> shard across both v7x TensorCores.
            # VMEM per step is <1 MiB at tile_m=2048; only at tile_m>=16K on v5e
            # would an explicit vmem_limit_bytes be needed.
            dimension_semantics=("parallel",),
        ),
    )(xp, w_slab, b_slab)

    # packed row i, lane j  ->  batch row i*rep + j  (row-major reshape is exact).
    return out.reshape(n_pad, 1)[:n]


# ----------------------------------------------------------------------------
# Parameter init / packing
# ----------------------------------------------------------------------------
def init_params(key, n_struct, n_hps):
    """nn.Linear-style U(-1/sqrt(fan_in), 1/sqrt(fan_in)) init.
    Weights stored transposed: [in_features, out_features]."""
    def linear(k, fan_in, fan_out):
        kw, kb = jax.random.split(k)
        bound = 1.0 / jnp.sqrt(jnp.float32(fan_in))
        w = jax.random.uniform(kw, (fan_in, fan_out), jnp.float32, -bound, bound)
        b = jax.random.uniform(kb, (1, fan_out), jnp.float32, -bound, bound)
        return w, b

    k1, k2, k3, k4, k5 = jax.random.split(key, 5)
    w_s1, b_s1 = linear(k1, n_struct, 10)
    w_s2, b_s2 = linear(k2, 10, 10)
    w_h1, b_h1 = linear(k3, n_hps, 6)
    w_i, b_i = linear(k4, 10 + 6, 8)
    w_f, b_f = linear(k5, 8, 1)
    return (w_s1, b_s1, w_s2, b_s2, w_h1, b_h1, w_i, b_i, w_f, b_f)


def _block_diag(block, rep):
    r, c = block.shape
    out = jnp.zeros((rep * r, rep * c), block.dtype)
    for j in range(rep):
        out = out.at[j * r:(j + 1) * r, j * c:(j + 1) * c].set(block)
    return out


def pack_params(params, n_struct, n_hps, rep=4):
    """Fuse the 5 Linear layers into 2 kernel-side slabs (exact algebra), then
    replicate `rep`-way block-diagonally for lane-dense batch packing.

    w_slab [rep*r1 + 3*rep*16, rep*16] (bf16):
      rows [0, rep*r1)        rep copies of block-diag layer 1 (W_s1 | W_h1)
      next rep*16 rows        rep copies of block-diag layer 2 (W_s2 | I_6)
      next rep*16 rows        rep copies of integrate (W_i in cols 0:8, rest 0)
      next rep*16 rows        Wf: column j <- [W_f ; b_f ; 0_7] for replica j
    b_slab [8, rep*16] (f32):
      row 0: tile([b_s1|b_h1])   row 1: tile([b_s2|0_6])
      row 2: tile([b_i|1.0|0_7]) (the 1.0 lane survives ReLU and carries b_f)
      rows 3..7: zero.
    Invariants relied on by the fusion: Wi cols 8:16 zero per block, bi lane 8
    of each block exactly 1.0, hps lanes post-ReLU nonnegative.
    """
    (w_s1, b_s1, w_s2, b_s2, w_h1, b_h1, w_i, b_i, w_f, b_f) = params
    f32 = jnp.float32
    n_in = n_struct + n_hps
    r1 = ((n_in + 7) // 8) * 8

    w1 = jnp.zeros((r1, 16), f32)
    w1 = w1.at[0:n_struct, 0:10].set(w_s1)
    w1 = w1.at[n_struct:n_in, 10:16].set(w_h1)

    w2 = jnp.zeros((16, 16), f32)
    w2 = w2.at[0:10, 0:10].set(w_s2)
    w2 = w2.at[10:16, 10:16].set(jnp.eye(6, dtype=f32))

    wi = jnp.zeros((16, 16), f32).at[:, 0:8].set(w_i)

    wf_col = jnp.concatenate([w_f[:, 0], b_f[0], jnp.zeros((7,), f32)])  # [16]
    wf_big = jnp.zeros((rep * 16, rep * 16), f32)
    for j in range(rep):
        wf_big = wf_big.at[16 * j:16 * (j + 1), j].set(wf_col)

    w_slab = jnp.concatenate(
        [_block_diag(w1, rep), _block_diag(w2, rep), _block_diag(wi, rep), wf_big],
        axis=0).astype(jnp.bfloat16)

    b1 = jnp.concatenate([b_s1, b_h1], axis=1)                        # [1, 16]
    b2 = jnp.concatenate([b_s2, jnp.zeros((1, 6), f32)], axis=1)
    bi = jnp.zeros((1, 16), f32).at[:, 0:8].set(b_i).at[0, 8].set(1.0)
    b_slab = jnp.concatenate(
        [jnp.tile(b1, (1, rep)), jnp.tile(b2, (1, rep)), jnp.tile(bi, (1, rep)),
         jnp.zeros((5, rep * 16), f32)], axis=0)                      # [8, rep*16]

    return w_slab, b_slab, r1, rep


def pick_rep():
    """4-way packing on 128-wide-MXU chips (v4/v5e), 8-way on v6e/v7x."""
    try:
        kind = jax.devices()[0].device_kind.lower()
    except Exception:
        return 4
    if ("v6" in kind) or ("v7" in kind) or ("7x" in kind):
        return 8
    return 4


# ----------------------------------------------------------------------------
# References
# ----------------------------------------------------------------------------
def reference_forward(x_struct, x_hps, params):
    """Pure-JAX f32 mirror of the PyTorch TWIG_Base forward (unfused weights)."""
    (w_s1, b_s1, w_s2, b_s2, w_h1, b_h1, w_i, b_i, w_f, b_f) = params
    h = jnp.maximum(x_struct @ w_s1 + b_s1, 0.0)
    h = jnp.maximum(h @ w_s2 + b_s2, 0.0)
    g = jnp.maximum(x_hps @ w_h1 + b_h1, 0.0)
    z = jnp.maximum(jnp.concatenate([h, g], axis=1) @ w_i + b_i, 0.0)
    return 1.0 / (1.0 + jnp.exp(-(z @ w_f + b_f)))


def mirror_reference(x_struct, x_hps, params):
    """Mirror of the kernel's exact numerics: bf16 inputs & weights, f32 MXU
    accumulation, f32 bias+ReLU, bf16 re-cast before every matmul."""
    (w_s1, b_s1, w_s2, b_s2, w_h1, b_h1, w_i, b_i, w_f, b_f) = params
    bf = jnp.bfloat16
    f32 = jnp.float32

    def mm(a, w):
        return jnp.dot(a.astype(bf), w.astype(bf), preferred_element_type=f32)

    h = jnp.maximum(mm(x_struct, w_s1) + b_s1, 0.0)
    h = jnp.maximum(mm(h, w_s2) + b_s2, 0.0)
    g = jnp.maximum(mm(x_hps, w_h1) + b_h1, 0.0)
    z = jnp.maximum(mm(jnp.concatenate([h, g], axis=1), w_i) + b_i, 0.0)
    logit = mm(z, w_f) + b_f.astype(bf).astype(f32)   # b_f rides a bf16 constant lane
    return 1.0 / (1.0 + jnp.exp(-logit))


# ----------------------------------------------------------------------------
if __name__ == "__main__":
    n_struct = 23   # structural features
    n_hps = 9       # hyperparameter features

    rep = pick_rep()
    key = jax.random.PRNGKey(0)
    k_params, k_x = jax.random.split(key)

    params = init_params(k_params, n_struct, n_hps)
    packed = pack_params(params, n_struct, n_hps, rep=rep)

    # One small aligned batch and one ragged batch (exercises the padding path).
    for batch in (128, 7):
        kxs, kxh = jax.random.split(jax.random.fold_in(k_x, batch))
        x_struct = jax.random.normal(kxs, (batch, n_struct), jnp.float32)
        x_hps = jax.random.normal(kxh, (batch, n_hps), jnp.float32)

        out = jax.block_until_ready(
            twig_base_forward(x_struct, x_hps, packed, tile_m=2048))
        assert out.shape == (batch, 1)

        # Tight check vs. a reference with the kernel's exact bf16/f32 numerics.
        ref_exact = mirror_reference(x_struct, x_hps, params)
        assert jnp.allclose(out, ref_exact, atol=1e-4, rtol=1e-4), \
            f"mismatch vs bf16-mirror reference (batch={batch}, rep={rep})"

        # Loose check vs. the f32 PyTorch-semantics reference (documents the
        # bf16 quantization of inputs/weights; outputs are sigmoids in (0,1)).
        xs_q = x_struct.astype(jnp.bfloat16).astype(jnp.float32)
        xh_q = x_hps.astype(jnp.bfloat16).astype(jnp.float32)
        ref_f32 = reference_forward(xs_q, xh_q, params)
        assert jnp.allclose(out, ref_f32, atol=5e-2), \
            f"semantic drift vs f32 reference (batch={batch}, rep={rep})"

    print("KERNEL_OK")
</pallas_src>

<mosaic_0001>
module attributes {stable_mosaic.version = 11 : i64} {
  func.func @twig_fused_kernel(%arg0: i32, %arg1: memref<32x128xbf16, #tpu.memory_space<vmem>>, %arg2: memref<320x64xbf16, #tpu.memory_space<vmem>>, %arg3: memref<8x64xf32, #tpu.memory_space<vmem>>, %arg4: memref<32x4xf32, #tpu.memory_space<vmem>>) attributes {dimension_semantics = [#tpu.dimension_semantics<parallel>], iteration_bounds = array<i64: 1>, scalar_prefetch = 0 : i64, scratch_operands = 0 : i64, tpu.core_type = #tpu.core_type<tc>, window_params = [{transform_indices = @transform_0, window_bounds = array<i64: 32, 128>}, {pipeline_mode = #tpu.pipeline_mode<synchronous>, transform_indices = @transform_1, window_bounds = array<i64: 320, 64>}, {pipeline_mode = #tpu.pipeline_mode<synchronous>, transform_indices = @transform_2, window_bounds = array<i64: 8, 64>}, {transform_indices = @transform_3, window_bounds = array<i64: 32, 4>}]} {
    %c0 = arith.constant 0 : index
    %c0_0 = arith.constant 0 : index
    %0 = vector.load %arg1[%c0, %c0_0] : memref<32x128xbf16, #tpu.memory_space<vmem>>, vector<32x128xbf16>
    %c0_1 = arith.constant 0 : index
    %c0_2 = arith.constant 0 : index
    %1 = vector.load %arg2[%c0_1, %c0_2] : memref<320x64xbf16, #tpu.memory_space<vmem>>, vector<128x64xbf16>
    %c128 = arith.constant 128 : index
    %c0_3 = arith.constant 0 : index
    %2 = vector.load %arg2[%c128, %c0_3] : memref<320x64xbf16, #tpu.memory_space<vmem>>, vector<64x64xbf16>
    %c192 = arith.constant 192 : index
    %c0_4 = arith.constant 0 : index
    %3 = vector.load %arg2[%c192, %c0_4] : memref<320x64xbf16, #tpu.memory_space<vmem>>, vector<64x64xbf16>
    %c256 = arith.constant 256 : index
    %c0_5 = arith.constant 0 : index
    %4 = vector.load %arg2[%c256, %c0_5] : memref<320x64xbf16, #tpu.memory_space<vmem>>, vector<64x64xbf16>
    %c0_6 = arith.constant 0 : index
    %c0_7 = arith.constant 0 : index
    %5 = vector.load %arg3[%c0_6, %c0_7] : memref<8x64xf32, #tpu.memory_space<vmem>>, vector<8x64xf32>
    %6 = vector.extract_strided_slice %5 {offsets = [0, 0], sizes = [1, 64], strides = [1, 1]} : vector<8x64xf32> to vector<1x64xf32>
    %7 = vector.extract_strided_slice %5 {offsets = [1, 0], sizes = [1, 64], strides = [1, 1]} : vector<8x64xf32> to vector<1x64xf32>
    %8 = vector.extract_strided_slice %5 {offsets = [2, 0], sizes = [1, 64], strides = [1, 1]} : vector<8x64xf32> to vector<1x64xf32>
    %cst = arith.constant dense<0.000000e+00> : vector<32x64xf32>
    %9 = tpu.matmul %0, %1, %cst {dimension_numbers = #tpu.dot_dimension_numbers<[1], [0], [0], [1], [0, 0, 1, 1], [], []>} : vector<32x128xbf16>, vector<128x64xbf16>, vector<32x64xf32> -> vector<32x64xf32>
    %10 = vector.broadcast %6 : vector<1x64xf32> to vector<32x64xf32>
    %11 = arith.addf %9, %10 : vector<32x64xf32>
    %cst_8 = arith.constant 0.000000e+00 : f32
    %12 = vector.broadcast %cst_8 : f32 to vector<32x64xf32>
    %13 = arith.maximumf %11, %12 : vector<32x64xf32>
    %14 = arith.truncf %13 : vector<32x64xf32> to vector<32x64xbf16>
    %cst_9 = arith.constant dense<0.000000e+00> : vector<32x64xf32>
    %15 = tpu.matmul %14, %2, %cst_9 {dimension_numbers = #tpu.dot_dimension_numbers<[1], [0], [0], [1], [0, 0, 1, 1], [], []>} : vector<32x64xbf16>, vector<64x64xbf16>, vector<32x64xf32> -> vector<32x64xf32>
    %16 = vector.broadcast %7 : vector<1x64xf32> to vector<32x64xf32>
    %17 = arith.addf %15, %16 : vector<32x64xf32>
    %cst_10 = arith.constant 0.000000e+00 : f32
    %18 = vector.broadcast %cst_10 : f32 to vector<32x64xf32>
    %19 = arith.maximumf %17, %18 : vector<32x64xf32>
    %20 = arith.truncf %19 : vector<32x64xf32> to vector<32x64xbf16>
    %cst_11 = arith.constant dense<0.000000e+00> : vector<32x64xf32>
    %21 = tpu.matmul %20, %3, %cst_11 {dimension_numbers = #tpu.dot_dimension_numbers<[1], [0], [0], [1], [0, 0, 1, 1], [], []>} : vector<32x64xbf16>, vector<64x64xbf16>, vector<32x64xf32> -> vector<32x64xf32>
    %22 = vector.broadcast %8 : vector<1x64xf32> to vector<32x64xf32>
    %23 = arith.addf %21, %22 : vector<32x64xf32>
    %cst_12 = arith.constant 0.000000e+00 : f32
    %24 = vector.broadcast %cst_12 : f32 to vector<32x64xf32>
    %25 = arith.maximumf %23, %24 : vector<32x64xf32>
    %26 = arith.truncf %25 : vector<32x64xf32> to vector<32x64xbf16>
    %cst_13 = arith.constant dense<0.000000e+00> : vector<32x64xf32>
    %27 = tpu.matmul %26, %4, %cst_13 {dimension_numbers = #tpu.dot_dimension_numbers<[1], [0], [0], [1], [0, 0, 1, 1], [], []>} : vector<32x64xbf16>, vector<64x64xbf16>, vector<32x64xf32> -> vector<32x64xf32>
    %28 = vector.extract_strided_slice %27 {offsets = [0, 0], sizes = [32, 4], strides = [1, 1]} : vector<32x64xf32> to vector<32x4xf32>
    %cst_14 = arith.constant 0.000000e+00 : f32
    %29 = vector.broadcast %cst_14 : f32 to vector<32x4xf32>
    %30 = arith.subf %29, %28 : vector<32x4xf32>
    %31 = math.exp %30 : vector<32x4xf32>
    %cst_15 = arith.constant 1.000000e+00 : f32
    %32 = vector.broadcast %cst_15 : f32 to vector<32x4xf32>
    %33 = arith.addf %32, %31 : vector<32x4xf32>
    %cst_16 = arith.constant 1.000000e+00 : f32
    %34 = vector.broadcast %cst_16 : f32 to vector<32x4xf32>
    %35 = arith.divf %34, %33 : vector<32x4xf32>
    %c0_17 = arith.constant 0 : index
    %c0_18 = arith.constant 0 : index
    %36 = vector.load %arg4[%c0_17, %c0_18] : memref<32x4xf32, #tpu.memory_space<vmem>>, vector<32x4xf32>
    tpu.vector_store %arg4[%c0_17, %c0_18], %35 {strides = array<i32>} : memref<32x4xf32, #tpu.memory_space<vmem>>, vector<32x4xf32>,
    return
  }
  func.func @transform_0(%arg0: i32) -> (i32, i32) {
    %c0_i32 = arith.constant 0 : i32
    %c0_i32_0 = arith.constant 0 : i32
    return %arg0, %c0_i32 : i32, i32
  }
  func.func @transform_1(%arg0: i32) -> (i32, i32) {
    %c0_i32 = arith.constant 0 : i32
    %c0_i32_0 = arith.constant 0 : i32
    %c0_i32_1 = arith.constant 0 : i32
    return %c0_i32, %c0_i32_0 : i32, i32
  }
  func.func @transform_2(%arg0: i32) -> (i32, i32) {
    %c0_i32 = arith.constant 0 : i32
    %c0_i32_0 = arith.constant 0 : i32
    %c0_i32_1 = arith.constant 0 : i32
    return %c0_i32, %c0_i32_0 : i32, i32
  }
  func.func @transform_3(%arg0: i32) -> (i32, i32) {
    %c0_i32 = arith.constant 0 : i32
    %c0_i32_0 = arith.constant 0 : i32
    return %arg0, %c0_i32 : i32, i32
  }
}

</mosaic_0001>

<llo_original>
// kernel: tpu_custom_call.1
$region0: #{tpu_custom_call.1}
  #allocation0 [shape = 'u32[]', space=smem, size = 0x4, offset = 0x4, fixed_abs, tag = 'smem constant byte address 0x4 - core index']
  #allocation1 [shape = 'u32[144,128]{1,0:T(1,128)}', space=vmem, size = 0x12000, scoped, tag = 'internal scratch']
  %s0 = inlined_call_operand.vmem [shape: bf16[32,128], index: 0, kind: input, shape index: {}]
  %s1 = inlined_call_operand.vmem [shape: bf16[320,64], index: 1, kind: input, shape index: {}]
  %s2 = inlined_call_operand.vmem [shape: f32[8,64], index: 2, kind: input, shape index: {}]
  %s3 = inlined_call_operand.vmem [shape: f32[32,4], index: 3, kind: output, shape index: {}]
  %s4 = sld [smem:[#allocation0]]
  $region22: #{tpu_custom_call.1} parent=0
    _
  %s6 = ssub.s32 1, %s4
  %s7 = scalar_select 0, %s6, %s4
  // Predicated region
  $region2: #{tpu_custom_call.1} parent=0 // pred_check
    _
  $region3: #{tpu_custom_call.1} parent=0 // pred_check_branch
    %9 = sbr.rel (0) target = $region5
  $region4: #{tpu_custom_call.1} parent=0 // pred_region
    _
  $region5: #{tpu_custom_call.1} parent=0 // pred_fallthru
    _
  // Predicated region
  $region6: #{tpu_custom_call.1} parent=0 // pred_check
    _
  $region7: #{tpu_custom_call.1} parent=0 // pred_check_branch
    %11 = sbr.rel (0) target = $region9
  $region8: #{tpu_custom_call.1} parent=0 // pred_region
    _
  $region9: #{tpu_custom_call.1} parent=0 // pred_fallthru
    _
  // Predicated region
  $region10: #{tpu_custom_call.1} parent=0 // pred_check
    _
  $region11: #{tpu_custom_call.1} parent=0 // pred_check_branch
    %13 = sbr.rel (0) target = $region13
  $region12: #{tpu_custom_call.1} parent=0 // pred_region
    _
  $region13: #{tpu_custom_call.1} parent=0 // pred_fallthru
    _
  %v15 = vld [vmem:[%s0] sm:$0xf]
  %v16 = vld [vmem:[%s0 + $0x4] sm:$0xf]
  %v17 = vld [vmem:[%s0 + $0x8] sm:$0xf]
  %v18 = vld [vmem:[%s0 + $0xc] sm:$0xf]
  %v19 = vld [vmem:[%s1] sm:$0xf]
  %v20 = vld [vmem:[%s1 + $0x4] sm:$0xf]
  %v21 = vld [vmem:[%s1 + $0x8] sm:$0xf]
  %v22 = vld [vmem:[%s1 + $0xc] sm:$0xf]
  %v23 = vld [vmem:[%s1 + $0x10] sm:$0xf]
  %v24 = vld [vmem:[%s1 + $0x14] sm:$0xf]
  %v25 = vld [vmem:[%s1 + $0x18] sm:$0xf]
  %v26 = vld [vmem:[%s1 + $0x1c] sm:$0xf]
  %v27 = vld [vmem:[%s1 + $0x20] sm:$0xf]
  %v28 = vld [vmem:[%s1 + $0x24] sm:$0xf]
  %v29 = vld [vmem:[%s1 + $0x28] sm:$0xf]
  %v30 = vld [vmem:[%s1 + $0x2c] sm:$0xf]
  %v31 = vld [vmem:[%s1 + $0x30] sm:$0xf]
  %v32 = vld [vmem:[%s1 + $0x34] sm:$0xf]
  %v33 = vld [vmem:[%s1 + $0x38] sm:$0xf]
  %v34 = vld [vmem:[%s1 + $0x3c] sm:$0xf]
  %v35 = vld [vmem:[%s1 + $0x40] sm:$0xf]
  %v36 = vld [vmem:[%s1 + $0x44] sm:$0xf]
  %v37 = vld [vmem:[%s1 + $0x48] sm:$0xf]
  %v38 = vld [vmem:[%s1 + $0x4c] sm:$0xf]
  %v39 = vld [vmem:[%s1 + $0x50] sm:$0xf]
  %v40 = vld [vmem:[%s1 + $0x54] sm:$0xf]
  %v41 = vld [vmem:[%s1 + $0x58] sm:$0xf]
  %v42 = vld [vmem:[%s1 + $0x5c] sm:$0xf]
  %v43 = vld [vmem:[%s1 + $0x60] sm:$0xf]
  %v44 = vld [vmem:[%s1 + $0x64] sm:$0xf]
  %v45 = vld [vmem:[%s1 + $0x68] sm:$0xf]
  %v46 = vld [vmem:[%s1 + $0x6c] sm:$0xf]
  %v47 = vld [vmem:[%s1 + $0x70] sm:$0xf]
  %v48 = vld [vmem:[%s1 + $0x74] sm:$0xf]
  %v49 = vld [vmem:[%s1 + $0x78] sm:$0xf]
  %v50 = vld [vmem:[%s1 + $0x7c] sm:$0xf]
  %v51 = vld [vmem:[%s1 + $0x80] sm:$0xf]
  %v52 = vld [vmem:[%s1 + $0x84] sm:$0xf]
  %v53 = vld [vmem:[%s1 + $0x88] sm:$0xf]
  %v54 = vld [vmem:[%s1 + $0x8c] sm:$0xf]
  %v55 = vld [vmem:[%s1 + $0x90] sm:$0xf]
  %v56 = vld [vmem:[%s1 + $0x94] sm:$0xf]
  %v57 = vld [vmem:[%s1 + $0x98] sm:$0xf]
  %v58 = vld [vmem:[%s1 + $0x9c] sm:$0xf]
  %v59 = vld [vmem:[%s2] sm:$0xff]
  %v60 = vlaneseq
  %v61 = vshrl.u32 %v60, 7
  %v62 = vsub.s32 0, %v61
  %v63 = vrot.slane %v59, %v62
  %v68 = vunpack.c.l.b16 %v15
  %v69 = vunpack.c.l.b16 %v16
  %v70 = vunpack.c.l.b16 %v17
  %v71 = vunpack.c.l.b16 %v18
  %v72 = vpack.c.b16 %v69, %v68
  %v73 = vpack.c.b16 %v71, %v70
  %v92 = vunpack.c.l.b16 %v19
  %v93 = vunpack.c.l.b16 %v20
  %v94 = vunpack.c.l.b16 %v21
  %v95 = vunpack.c.l.b16 %v22
  %v96 = vunpack.c.l.b16 %v23
  %v97 = vunpack.c.l.b16 %v24
  %v98 = vunpack.c.l.b16 %v25
  %v99 = vunpack.c.l.b16 %v26
  %v100 = vunpack.c.l.b16 %v27
  %v101 = vunpack.c.l.b16 %v28
  %v102 = vunpack.c.l.b16 %v29
  %v103 = vunpack.c.l.b16 %v30
  %v104 = vunpack.c.l.b16 %v31
  %v105 = vunpack.c.l.b16 %v32
  %v106 = vunpack.c.l.b16 %v33
  %v107 = vunpack.c.l.b16 %v34
  %v108 = vpack.c.b16 %v93, %v92
  %v109 = vpack.c.b16 %v95, %v94
  %v110 = vpack.c.b16 %v97, %v96
  %v111 = vpack.c.b16 %v99, %v98
  %v112 = vpack.c.b16 %v101, %v100
  %v113 = vpack.c.b16 %v103, %v102
  %v114 = vpack.c.b16 %v105, %v104
  %v115 = vpack.c.b16 %v107, %v106
  %124 = vmatprep.subr.bf16.mxu0 0
  %125 = vmatpush1.bf16.msra.mxu0 %v115
  %126 = vmatprep.subr.bf16.mxu0 0
  %127 = vmatpush1.bf16.msra.mxu0 %v114
  %128 = vmatprep.subr.bf16.mxu0 0
  %129 = vmatpush1.bf16.msra.mxu0 %v113
  %130 = vmatprep.subr.bf16.mxu0 0
  %131 = vmatpush1.bf16.msra.mxu0 %v112
  %132 = vmatprep.subr.bf16.mxu0 0
  %133 = vmatpush1.bf16.msra.mxu0 %v111
  %134 = vmatprep.subr.bf16.mxu0 0
  %135 = vmatpush1.bf16.msra.mxu0 %v110
  %136 = vmatprep.subr.bf16.mxu0 0
  %137 = vmatpush1.bf16.msra.mxu0 %v109
  %138 = vmatprep.subr.bf16.mxu0 0
  %139 = vmatpush1.bf16.msra.mxu0 %v108
  %140 = vmatprep.subr.bf16.mxu0 0
  %141 = vmatpush2.bf16.msra.mxu0 0
  %142 = vmatprep.subr.bf16.mxu0 0
  %143 = vmatpush2.bf16.msra.mxu0 0
  %144 = vmatprep.subr.bf16.mxu0 0
  %145 = vmatpush2.bf16.msra.mxu0 0
  %146 = vmatprep.subr.bf16.mxu0 0
  %147 = vmatpush2.bf16.msra.mxu0 0
  %148 = vmatprep.subr.bf16.mxu0 0
  %149 = vmatpush2.bf16.msra.mxu0 0
  %150 = vmatprep.subr.bf16.mxu0 0
  %151 = vmatpush2.bf16.msra.mxu0 0
  %152 = vmatprep.subr.bf16.mxu0 0
  %153 = vmatpush2.bf16.msra.mxu0 0
  %154 = vmatprep.subr.bf16.mxu0 0
  %155 = vmatpush2.bf16.msra.mxu0 0
  %156 = vmatprep.mubr.bf16.mxu0 0
  %157 = vmatmul.mubr.bf16.gmra.mxu0 %v72
  %v158 = vpop.f32.mrf.mxu0
  %v159 = vadd.f32 %v63, %v158
  %v160 = vpop.f32.mrf.mxu0
  %v161 = vpop.f32.mrf.mxu0
  %v162 = vadd.f32 %v63, %v161
  %v163 = vpop.f32.mrf.mxu0
  %164 = vmatprep.mubr.bf16.mxu0 0
  %165 = vmatmul.mubr.bf16.gmra.mxu0 %v73
  %v166 = vpop.f32.mrf.mxu0
  %v167 = vadd.f32 %v63, %v166
  %v168 = vpop.f32.mrf.mxu0
  %v169 = vpop.f32.mrf.mxu0
  %v170 = vadd.f32 %v63, %v169
  %v171 = vpop.f32.mrf.mxu0
  %172 = vdwg.mxu0
  %v173 = vmax.f32 %v159, 0.0
  %v174 = vmax.f32 %v162, 0.0
  %v175 = vmax.f32 %v167, 0.0
  %v176 = vmax.f32 %v170, 0.0
  %v177 = vpack.c.bf16 %v174, %v173
  %v178 = vpack.c.bf16 %v176, %v175
  %v179 = vlaneseq
  %v180 = vshrl.u32 %v179, 7
  %v181 = vsub.s32 1, %v180
  %v182 = vrot.slane %v59, %v181
  %v191 = vunpack.c.l.b16 %v35
  %v192 = vunpack.c.l.b16 %v36
  %v193 = vunpack.c.l.b16 %v37
  %v194 = vunpack.c.l.b16 %v38
  %v195 = vunpack.c.l.b16 %v39
  %v196 = vunpack.c.l.b16 %v40
  %v197 = vunpack.c.l.b16 %v41
  %v198 = vunpack.c.l.b16 %v42
  %v199 = vpack.c.b16 %v192, %v191
  %v200 = vpack.c.b16 %v194, %v193
  %v201 = vpack.c.b16 %v196, %v195
  %v202 = vpack.c.b16 %v198, %v197
  %vm207 = vcmask 523264
  %v209 = vsel %vm207, %v177, 0
  %v212 = vsel %vm207, %v178, 0
  %214 = vmatprep.subr.bf16.mxu0 0
  %215 = vmatpush1.bf16.msra.mxu0 0
  %216 = vmatprep.subr.bf16.mxu0 0
  %217 = vmatpush1.bf16.msra.mxu0 0
  %218 = vmatprep.subr.bf16.mxu0 0
  %219 = vmatpush1.bf16.msra.mxu0 0
  %220 = vmatprep.subr.bf16.mxu0 0
  %221 = vmatpush1.bf16.msra.mxu0 0
  %222 = vmatprep.subr.bf16.mxu0 0
  %223 = vmatpush1.bf16.msra.mxu0 %v202
  %224 = vmatprep.subr.bf16.mxu0 0
  %225 = vmatpush1.bf16.msra.mxu0 %v201
  %226 = vmatprep.subr.bf16.mxu0 0
  %227 = vmatpush1.bf16.msra.mxu0 %v200
  %228 = vmatprep.subr.bf16.mxu0 0
  %229 = vmatpush1.bf16.msra.mxu0 %v199
  %230 = vmatprep.subr.bf16.mxu0 0
  %231 = vmatpush2.bf16.msra.mxu0 0
  %232 = vmatprep.subr.bf16.mxu0 0
  %233 = vmatpush2.bf16.msra.mxu0 0
  %234 = vmatprep.subr.bf16.mxu0 0
  %235 = vmatpush2.bf16.msra.mxu0 0
  %236 = vmatprep.subr.bf16.mxu0 0
  %237 = vmatpush2.bf16.msra.mxu0 0
  %238 = vmatprep.subr.bf16.mxu0 0
  %239 = vmatpush2.bf16.msra.mxu0 0
  %240 = vmatprep.subr.bf16.mxu0 0
  %241 = vmatpush2.bf16.msra.mxu0 0
  %242 = vmatprep.subr.bf16.mxu0 0
  %243 = vmatpush2.bf16.msra.mxu0 0
  %244 = vmatprep.subr.bf16.mxu0 0
  %245 = vmatpush2.bf16.msra.mxu0 0
  %246 = vmatprep.mubr.bf16.mxu0 0
  %247 = vmatmul.mubr.bf16.gmra.mxu0 %v209
  %v248 = vpop.f32.mrf.mxu0
  %v249 = vadd.f32 %v182, %v248
  %v250 = vpop.f32.mrf.mxu0
  %v251 = vpop.f32.mrf.mxu0
  %v252 = vadd.f32 %v182, %v251
  %v253 = vpop.f32.mrf.mxu0
  %254 = vmatprep.mubr.bf16.mxu0 0
  %255 = vmatmul.mubr.bf16.gmra.mxu0 %v212
  %v256 = vpop.f32.mrf.mxu0
  %v257 = vadd.f32 %v182, %v256
  %v258 = vpop.f32.mrf.mxu0
  %v259 = vpop.f32.mrf.mxu0
  %v260 = vadd.f32 %v182, %v259
  %v261 = vpop.f32.mrf.mxu0
  %262 = vdwg.mxu0
  %v263 = vmax.f32 %v249, 0.0
  %v264 = vmax.f32 %v252, 0.0
  %v265 = vmax.f32 %v257, 0.0
  %v266 = vmax.f32 %v260, 0.0
  %v267 = vpack.c.bf16 %v264, %v263
  %v268 = vpack.c.bf16 %v266, %v265
  %v269 = vlaneseq
  %v270 = vshrl.u32 %v269, 7
  %v271 = vsub.s32 2, %v270
  %v272 = vrot.slane %v59, %v271
  %v281 = vunpack.c.l.b16 %v43
  %v282 = vunpack.c.l.b16 %v44
  %v283 = vunpack.c.l.b16 %v45
  %v284 = vunpack.c.l.b16 %v46
  %v285 = vunpack.c.l.b16 %v47
  %v286 = vunpack.c.l.b16 %v48
  %v287 = vunpack.c.l.b16 %v49
  %v288 = vunpack.c.l.b16 %v50
  %v289 = vpack.c.b16 %v282, %v281
  %v290 = vpack.c.b16 %v284, %v283
  %v291 = vpack.c.b16 %v286, %v285
  %v292 = vpack.c.b16 %v288, %v287
  %v298 = vsel %vm207, %v267, 0
  %v301 = vsel %vm207, %v268, 0
  %303 = vmatprep.subr.bf16.mxu0 0
  %304 = vmatpush1.bf16.msra.mxu0 0
  %305 = vmatprep.subr.bf16.mxu0 0
  %306 = vmatpush1.bf16.msra.mxu0 0
  %307 = vmatprep.subr.bf16.mxu0 0
  %308 = vmatpush1.bf16.msra.mxu0 0
  %309 = vmatprep.subr.bf16.mxu0 0
  %310 = vmatpush1.bf16.msra.mxu0 0
  %311 = vmatprep.subr.bf16.mxu0 0
  %312 = vmatpush1.bf16.msra.mxu0 %v292
  %313 = vmatprep.subr.bf16.mxu0 0
  %314 = vmatpush1.bf16.msra.mxu0 %v291
  %315 = vmatprep.subr.bf16.mxu0 0
  %316 = vmatpush1.bf16.msra.mxu0 %v290
  %317 = vmatprep.subr.bf16.mxu0 0
  %318 = vmatpush1.bf16.msra.mxu0 %v289
  %319 = vmatprep.subr.bf16.mxu0 0
  %320 = vmatpush2.bf16.msra.mxu0 0
  %321 = vmatprep.subr.bf16.mxu0 0
  %322 = vmatpush2.bf16.msra.mxu0 0
  %323 = vmatprep.subr.bf16.mxu0 0
  %324 = vmatpush2.bf16.msra.mxu0 0
  %325 = vmatprep.subr.bf16.mxu0 0
  %326 = vmatpush2.bf16.msra.mxu0 0
  %327 = vmatprep.subr.bf16.mxu0 0
  %328 = vmatpush2.bf16.msra.mxu0 0
  %329 = vmatprep.subr.bf16.mxu0 0
  %330 = vmatpush2.bf16.msra.mxu0 0
  %331 = vmatprep.subr.bf16.mxu0 0
  %332 = vmatpush2.bf16.msra.mxu0 0
  %333 = vmatprep.subr.bf16.mxu0 0
  %334 = vmatpush2.bf16.msra.mxu0 0
  %335 = vmatprep.mubr.bf16.mxu0 0
  %336 = vmatmul.mubr.bf16.gmra.mxu0 %v298
  %v337 = vpop.f32.mrf.mxu0
  %v338 = vadd.f32 %v272, %v337
  %v339 = vpop.f32.mrf.mxu0
  %v340 = vpop.f32.mrf.mxu0
  %v341 = vadd.f32 %v272, %v340
  %v342 = vpop.f32.mrf.mxu0
  %343 = vmatprep.mubr.bf16.mxu0 0
  %344 = vmatmul.mubr.bf16.gmra.mxu0 %v301
  %v345 = vpop.f32.mrf.mxu0
  %v346 = vadd.f32 %v272, %v345
  %v347 = vpop.f32.mrf.mxu0
  %v348 = vpop.f32.mrf.mxu0
  %v349 = vadd.f32 %v272, %v348
  %v350 = vpop.f32.mrf.mxu0
  %351 = vdwg.mxu0
  %v352 = vmax.f32 %v338, 0.0
  %v353 = vmax.f32 %v341, 0.0
  %v354 = vmax.f32 %v346, 0.0
  %v355 = vmax.f32 %v349, 0.0
  %v356 = vpack.c.bf16 %v353, %v352
  %v357 = vpack.c.bf16 %v355, %v354
  %v366 = vunpack.c.l.b16 %v51
  %v367 = vunpack.c.l.b16 %v52
  %v368 = vunpack.c.l.b16 %v53
  %v369 = vunpack.c.l.b16 %v54
  %v370 = vunpack.c.l.b16 %v55
  %v371 = vunpack.c.l.b16 %v56
  %v372 = vunpack.c.l.b16 %v57
  %v373 = vunpack.c.l.b16 %v58
  %v374 = vpack.c.b16 %v367, %v366
  %v375 = vpack.c.b16 %v369, %v368
  %v376 = vpack.c.b16 %v371, %v370
  %v377 = vpack.c.b16 %v373, %v372
  %v383 = vsel %vm207, %v356, 0
  %v386 = vsel %vm207, %v357, 0
  %388 = vmatprep.subr.bf16.mxu0 0
  %389 = vmatpush1.bf16.msra.mxu0 0
  %390 = vmatprep.subr.bf16.mxu0 0
  %391 = vmatpush1.bf16.msra.mxu0 0
  %392 = vmatprep.subr.bf16.mxu0 0
  %393 = vmatpush1.bf16.msra.mxu0 0
  %394 = vmatprep.subr.bf16.mxu0 0
  %395 = vmatpush1.bf16.msra.mxu0 0
  %396 = vmatprep.subr.bf16.mxu0 0
  %397 = vmatpush1.bf16.msra.mxu0 %v377
  %398 = vmatprep.subr.bf16.mxu0 0
  %399 = vmatpush1.bf16.msra.mxu0 %v376
  %400 = vmatprep.subr.bf16.mxu0 0
  %401 = vmatpush1.bf16.msra.mxu0 %v375
  %402 = vmatprep.subr.bf16.mxu0 0
  %403 = vmatpush1.bf16.msra.mxu0 %v374
  %404 = vmatprep.subr.bf16.mxu0 0
  %405 = vmatpush2.bf16.msra.mxu0 0
  %406 = vmatprep.subr.bf16.mxu0 0
  %407 = vmatpush2.bf16.msra.mxu0 0
  %408 = vmatprep.subr.bf16.mxu0 0
  %409 = vmatpush2.bf16.msra.mxu0 0
  %410 = vmatprep.subr.bf16.mxu0 0
  %411 = vmatpush2.bf16.msra.mxu0 0
  %412 = vmatprep.subr.bf16.mxu0 0
  %413 = vmatpush2.bf16.msra.mxu0 0
  %414 = vmatprep.subr.bf16.mxu0 0
  %415 = vmatpush2.bf16.msra.mxu0 0
  %416 = vmatprep.subr.bf16.mxu0 0
  %417 = vmatpush2.bf16.msra.mxu0 0
  %418 = vmatprep.subr.bf16.mxu0 0
  %419 = vmatpush2.bf16.msra.mxu0 0
  %420 = vmatprep.mubr.bf16.mxu0 0
  %421 = vmatmul.mubr.bf16.gmra.mxu0 %v383
  %v422 = vpop.f32.mrf.mxu0
  %v423 = vadd.f32 0.0, %v422
  %v424 = vpop.f32.mrf.mxu0
  %v425 = vpop.f32.mrf.mxu0
  %v426 = vadd.f32 0.0, %v425
  %v427 = vpop.f32.mrf.mxu0
  %428 = vmatprep.mubr.bf16.mxu0 0
  %429 = vmatmul.mubr.bf16.gmra.mxu0 %v386
  %v430 = vpop.f32.mrf.mxu0
  %v431 = vadd.f32 0.0, %v430
  %v432 = vpop.f32.mrf.mxu0
  %v433 = vpop.f32.mrf.mxu0
  %v434 = vadd.f32 0.0, %v433
  %v435 = vpop.f32.mrf.mxu0
  %436 = vdwg.mxu0
  %v437 = vsub.f32 0.0, %v423
  %v438 = vsub.f32 0.0, %v426
  %v439 = vsub.f32 0.0, %v431
  %v440 = vsub.f32 0.0, %v434
  %v441 = vmul.f32 %v437, 1.442695
  %v442 = vpow.pop %v441
  %v443 = vmul.f32 %v438, 1.442695
  %v444 = vpow.pop %v443
  %v445 = vmul.f32 %v439, 1.442695
  %v446 = vpow.pop %v445
  %v447 = vmul.f32 %v440, 1.442695
  %v448 = vpow.pop %v447
  %v449 = vadd.f32 %v442, 1.0
  %v450 = vadd.f32 %v444, 1.0
  %v451 = vadd.f32 %v446, 1.0
  %v452 = vadd.f32 %v448, 1.0
  %v453 = vrcp.pop %v449
  %v454 = vmul.f32 1.0, %v453
  %v455 = vrcp.pop %v450
  %v456 = vmul.f32 1.0, %v455
  %v457 = vrcp.pop %v451
  %v458 = vmul.f32 1.0, %v457
  %v459 = vrcp.pop %v452
  %v460 = vmul.f32 1.0, %v459
  %vm461 = vcmask 31744
  %462 = vst.msk [vmem:[%s3] sm:$0xff] %vm461, %v454
  %463 = vst.msk [vmem:[%s3 + $0x8] sm:$0xff] %vm461, %v456
  %464 = vst.msk [vmem:[%s3 + $0x10] sm:$0xff] %vm461, %v458
  %465 = vst.msk [vmem:[%s3 + $0x18] sm:$0xff] %vm461, %v460
  // Predicated region
  $region14: #{tpu_custom_call.1} parent=0 // pred_check
    _
  $region15: #{tpu_custom_call.1} parent=0 // pred_check_branch
    %467 = sbr.rel (0) target = $region17
  $region16: #{tpu_custom_call.1} parent=0 // pred_region
    _
  $region17: #{tpu_custom_call.1} parent=0 // pred_fallthru
    _
  // Predicated region
  $region18: #{tpu_custom_call.1} parent=0 // pred_check
    _
  $region19: #{tpu_custom_call.1} parent=0 // pred_check_branch
    %469 = sbr.rel (0) target = $region21
  $region20: #{tpu_custom_call.1} parent=0 // pred_region
    _
  $region21: #{tpu_custom_call.1} parent=0 // pred_fallthru
    _

</llo_original>
